<compile_context>
chip_gen: v6e
topology: v6e:2x2x1
jax: 0.10.0
libtpu: 0.0.40
codegen_flags: <defaults>
</compile_context>

<pallas_src>
import functools
import math

import jax
import jax.numpy as jnp
from jax.experimental import pallas as pl
from jax.experimental.pallas import tpu as pltpu

PE_NORM = 10000.0

_VMEM_BUDGET_BYTES = 16 << 20   # double-buffered working-set target (all gens)
_VMEM_LIMIT_BYTES = 32 << 20    # scoped VMEM limit (safe on v5e/v6e/v7x)
_N_STREAMS = 4                  # pot in/out, cfg in/out (PE block is tiny)
_TINY_BYTES = 1 << 20           # below this, plain XLA fusion wins


# ---------------------------------------------------------------------------
# Sinusoidal PE table (matches the PyTorch buffer; kept in float32).
# ---------------------------------------------------------------------------
def build_pe_table(embed_size: int, max_chain_len: int = 128) -> jnp.ndarray:
    position = jnp.arange(0, max_chain_len, dtype=jnp.float32)[:, None]       # (L, 1)
    div_term = jnp.exp(
        jnp.arange(0, embed_size, 2, dtype=jnp.float32)
        * -(jnp.log(jnp.float32(PE_NORM)) / embed_size))                      # (ceil(E/2),)
    angles = position * div_term                                              # (L, ceil(E/2))
    pe = jnp.zeros((max_chain_len, embed_size), dtype=jnp.float32)
    pe = pe.at[:, 0::2].set(jnp.sin(angles))
    pe = pe.at[:, 1::2].set(jnp.cos(angles[:, : embed_size // 2]))
    return pe


# ---------------------------------------------------------------------------
# Kernel: streaming add; PE block either matches the data block (flattened
# path) or is (seq_tile, 1, E) and broadcasts over the batch/sublane axis.
# ---------------------------------------------------------------------------
def _pe_add_kernel(pot_ref, cfg_ref, pe_ref, out_pot_ref, out_cfg_ref):
    pe = pe_ref[...]                                   # float32
    out_pot_ref[...] = (pot_ref[...] + pe).astype(out_pot_ref.dtype)
    out_cfg_ref[...] = (cfg_ref[...] + pe).astype(out_cfg_ref.dtype)


# ---------------------------------------------------------------------------
# Tile choosers.
# ---------------------------------------------------------------------------
def _sublane_align(itemsize: int) -> int:
    # f32 -> 8 rows / vreg sublane group, bf16 -> 16, int8/fp8 -> 32.
    return {4: 8, 2: 16, 1: 32}.get(int(itemsize), 8)


def _choose_width_3d(batch, embed, itemsize, per_buf):
    """(batch_tile, embed_tile) for 3-D blocks: shrink batch (multiples of 8)
    first so the lane dim stays full/dense, then embed (multiples of 128)."""
    sub = _sublane_align(itemsize)
    unit = sub * itemsize
    batch_tile, embed_tile = batch, embed
    if batch_tile * embed_tile * unit <= per_buf:
        return batch_tile, embed_tile
    if batch > 8:
        want = max(8, per_buf // max(1, embed_tile * unit))
        batch_tile = min(batch, max(8, (want // 8) * 8))
    if batch_tile * embed_tile * unit > per_buf:
        want = max(128, per_buf // max(1, batch_tile * unit))
        embed_tile = min(embed, max(128, (want // 128) * 128))
    return batch_tile, embed_tile


def _choose_width_flat(batch, embed, itemsize, per_buf):
    """batch_tile for the flattened (S, B*E) path; batch_tile*E is a multiple
    of 128 whenever batch_tile < batch (lane-dense, (8,128)-legal)."""
    sub = _sublane_align(itemsize)
    unit = sub * itemsize
    if batch * embed * unit <= per_buf:
        return batch
    quantum = 128 // math.gcd(embed, 128)      # batches per 128-aligned chunk
    want = max(1, per_buf // max(1, embed * unit))
    bt = (want // quantum) * quantum
    if bt <= 0:
        bt = quantum
    return min(batch, bt)


def _choose_seq_tile(seq_len, row_bytes, itemsize, per_buf, other_blocks):
    """Seq rows per block: fits the per-buffer budget, sublane-aligned, and
    yields >=4 total grid steps when the sequence is long enough."""
    sub = _sublane_align(itemsize)
    max_rows = max(1, per_buf // max(1, row_bytes))
    tile = min(seq_len, max_rows)
    min_steps = pl.cdiv(4, max(1, other_blocks))      # want >=4 steps overall
    if min_steps > 1 and seq_len >= min_steps * sub:
        tile = min(tile, pl.cdiv(seq_len, min_steps))
    if tile < seq_len:
        tile = max(sub, (tile // sub) * sub)
    return min(seq_len, tile)


# ---------------------------------------------------------------------------
# Forward wrapper.
# ---------------------------------------------------------------------------
def positional_encoding_forward(potentials: jnp.ndarray,
                                configs: jnp.ndarray,
                                pe_table: jnp.ndarray,
                                *,
                                force_pallas: bool = False,
                                in_place: bool = False):
    """potentials, configs: (seq_len, batch, embed).  Returns
    (potentials + pe, configs + pe) with pe broadcast over batch."""
    seq_len, batch, embed = potentials.shape
    assert configs.shape == potentials.shape
    assert pe_table.shape[0] >= seq_len and pe_table.shape[1] == embed

    dtype = potentials.dtype
    itemsize = jnp.dtype(dtype).itemsize
    pe_slice = pe_table[:seq_len, :].astype(jnp.float32)           # (S, E) f32

    # Tiny workloads: fixed pallas_call overhead dominates; let XLA fuse it.
    if not force_pallas and 2 * seq_len * batch * embed * itemsize < _TINY_BYTES:
        pe_b = pe_slice[:, None, :]
        return ((potentials + pe_b).astype(dtype),
                (configs + pe_b).astype(configs.dtype))

    per_buf = max(1, _VMEM_BUDGET_BYTES // (_N_STREAMS * 2))

    if embed % 128 == 0:
        # ---- 3-D path: lane dim = embed (dense), PE broadcast over batch ----
        batch_tile, embed_tile = _choose_width_3d(batch, embed, itemsize, per_buf)
        n_batch = pl.cdiv(batch, batch_tile)
        n_embed = pl.cdiv(embed, embed_tile)
        seq_tile = _choose_seq_tile(seq_len, batch_tile * embed_tile * itemsize,
                                    itemsize, per_buf, n_batch * n_embed)
        n_seq = pl.cdiv(seq_len, seq_tile)
        grid = (n_seq, n_embed, n_batch)        # batch innermost -> PE block reused

        data_spec = pl.BlockSpec((seq_tile, batch_tile, embed_tile),
                                 lambda i, k, j: (i, j, k))
        pe_spec = pl.BlockSpec((seq_tile, 1, embed_tile),
                               lambda i, k, j: (i, 0, k))
        args = (potentials, configs, pe_slice[:, None, :])          # PE: (S, 1, E)
        out_shape = (jax.ShapeDtypeStruct((seq_len, batch, embed), dtype),
                     jax.ShapeDtypeStruct((seq_len, batch, embed), configs.dtype))
        pe_bytes = seq_len * embed * 4
        reshape_back = lambda o: o
    else:
        # ---- flattened path (embed < 128 / non-multiple): lane dim = B*E ----
        be = batch * embed
        batch_tile = _choose_width_flat(batch, embed, itemsize, per_buf)
        chunk = batch_tile * embed
        n_batch = pl.cdiv(batch, batch_tile)
        seq_tile = _choose_seq_tile(seq_len, chunk * itemsize, itemsize,
                                    per_buf, n_batch)
        n_seq = pl.cdiv(seq_len, seq_tile)
        grid = (n_seq, n_batch)

        data_spec = pl.BlockSpec((seq_tile, chunk), lambda i, j: (i, j))
        # PE duplicated only across ONE lane chunk (batch_tile rows), constant
        # over the batch-chunk axis so it stays VMEM-resident per seq tile.
        # TODO(synk): drop even this duplication via in-kernel jnp.tile once the
        #             minor-dim collapse is verified to lower for E % 128 != 0.
        pe_spec = pl.BlockSpec((seq_tile, chunk), lambda i, j: (i, 0))
        pe_arg = jnp.tile(pe_slice, (1, batch_tile))                 # (S, chunk) f32
        args = (potentials.reshape(seq_len, be),
                configs.reshape(seq_len, be), pe_arg)
        out_shape = (jax.ShapeDtypeStruct((seq_len, be), dtype),
                     jax.ShapeDtypeStruct((seq_len, be), configs.dtype))
        pe_bytes = seq_len * chunk * 4
        reshape_back = lambda o: o.reshape(seq_len, batch, embed)

    flops = 2 * seq_len * batch * embed
    bytes_accessed = 4 * seq_len * batch * embed * itemsize + pe_bytes

    out_pot, out_cfg = pl.pallas_call(
        _pe_add_kernel,
        out_shape=out_shape,
        grid=grid,
        in_specs=[data_spec, data_spec, pe_spec],
        out_specs=(data_spec, data_spec),
        compiler_params=pltpu.CompilerParams(
            dimension_semantics=("parallel",) * len(grid),
            vmem_limit_bytes=_VMEM_LIMIT_BYTES),
        cost_estimate=pl.CostEstimate(flops=flops, transcendentals=0,
                                      bytes_accessed=bytes_accessed),
        input_output_aliases=({0: 0, 1: 1} if in_place else {}),
    )(*args)

    return reshape_back(out_pot), reshape_back(out_cfg)


# ---------------------------------------------------------------------------
# Self-test (exercises both the flattened E<128 path and the 3-D E%128==0 path).
# ---------------------------------------------------------------------------
if __name__ == "__main__":
    max_chain_len = 128
    key = jax.random.PRNGKey(0)

    for seq_len, batch, embed_size in [(8, 2, 32), (8, 2, 128)]:
        key, k1, k2 = jax.random.split(key, 3)
        potentials = jax.random.normal(k1, (seq_len, batch, embed_size), jnp.float32)
        configs = jax.random.normal(k2, (seq_len, batch, embed_size), jnp.float32)
        pe_table = build_pe_table(embed_size, max_chain_len)

        out_pot, out_cfg = positional_encoding_forward(
            potentials, configs, pe_table, force_pallas=True)
        jax.block_until_ready((out_pot, out_cfg))

        pe_b = pe_table[:seq_len, :][:, None, :]
        ref_pot = potentials + pe_b
        ref_cfg = configs + pe_b
        assert out_pot.shape == (seq_len, batch, embed_size)
        assert out_cfg.shape == (seq_len, batch, embed_size)
        assert jnp.allclose(out_pot, ref_pot, atol=1e-6), "potentials mismatch"
        assert jnp.allclose(out_cfg, ref_cfg, atol=1e-6), "configs mismatch"

    print("KERNEL_OK")
</pallas_src>

<mosaic_0001>
module attributes {stable_mosaic.version = 11 : i64} {
  func.func @_pe_add_kernel(%arg0: i32, %arg1: i32, %arg2: memref<8x64xf32, #tpu.memory_space<vmem>>, %arg3: memref<8x64xf32, #tpu.memory_space<vmem>>, %arg4: memref<8x64xf32, #tpu.memory_space<vmem>>, %arg5: memref<8x64xf32, #tpu.memory_space<vmem>>, %arg6: memref<8x64xf32, #tpu.memory_space<vmem>>) attributes {dimension_semantics = [#tpu.dimension_semantics<parallel>, #tpu.dimension_semantics<parallel>], iteration_bounds = array<i64: 1, 1>, scalar_prefetch = 0 : i64, scratch_operands = 0 : i64, tpu.core_type = #tpu.core_type<tc>, window_params = [{transform_indices = @transform_0, window_bounds = array<i64: 8, 64>}, {transform_indices = @transform_1, window_bounds = array<i64: 8, 64>}, {transform_indices = @transform_2, window_bounds = array<i64: 8, 64>}, {transform_indices = @transform_3, window_bounds = array<i64: 8, 64>}, {transform_indices = @transform_4, window_bounds = array<i64: 8, 64>}]} {
    %c0 = arith.constant 0 : index
    %c0_0 = arith.constant 0 : index
    %0 = vector.load %arg4[%c0, %c0_0] : memref<8x64xf32, #tpu.memory_space<vmem>>, vector<8x64xf32>
    %c0_1 = arith.constant 0 : index
    %c0_2 = arith.constant 0 : index
    %1 = vector.load %arg2[%c0_1, %c0_2] : memref<8x64xf32, #tpu.memory_space<vmem>>, vector<8x64xf32>
    %2 = arith.addf %1, %0 : vector<8x64xf32>
    %c0_3 = arith.constant 0 : index
    %c0_4 = arith.constant 0 : index
    %3 = vector.load %arg5[%c0_3, %c0_4] : memref<8x64xf32, #tpu.memory_space<vmem>>, vector<8x64xf32>
    tpu.vector_store %arg5[%c0_3, %c0_4], %2 {strides = array<i32>} : memref<8x64xf32, #tpu.memory_space<vmem>>, vector<8x64xf32>,
    %c0_5 = arith.constant 0 : index
    %c0_6 = arith.constant 0 : index
    %4 = vector.load %arg3[%c0_5, %c0_6] : memref<8x64xf32, #tpu.memory_space<vmem>>, vector<8x64xf32>
    %5 = arith.addf %4, %0 : vector<8x64xf32>
    %c0_7 = arith.constant 0 : index
    %c0_8 = arith.constant 0 : index
    %6 = vector.load %arg6[%c0_7, %c0_8] : memref<8x64xf32, #tpu.memory_space<vmem>>, vector<8x64xf32>
    tpu.vector_store %arg6[%c0_7, %c0_8], %5 {strides = array<i32>} : memref<8x64xf32, #tpu.memory_space<vmem>>, vector<8x64xf32>,
    return
  }
  func.func @transform_0(%arg0: i32, %arg1: i32) -> (i32, i32) {
    %c0_i32 = arith.constant 0 : i32
    return %arg0, %arg1 : i32, i32
  }
  func.func @transform_1(%arg0: i32, %arg1: i32) -> (i32, i32) {
    %c0_i32 = arith.constant 0 : i32
    return %arg0, %arg1 : i32, i32
  }
  func.func @transform_2(%arg0: i32, %arg1: i32) -> (i32, i32) {
    %c0_i32 = arith.constant 0 : i32
    %c0_i32_0 = arith.constant 0 : i32
    return %arg0, %c0_i32 : i32, i32
  }
  func.func @transform_3(%arg0: i32, %arg1: i32) -> (i32, i32) {
    %c0_i32 = arith.constant 0 : i32
    return %arg0, %arg1 : i32, i32
  }
  func.func @transform_4(%arg0: i32, %arg1: i32) -> (i32, i32) {
    %c0_i32 = arith.constant 0 : i32
    return %arg0, %arg1 : i32, i32
  }
}

</mosaic_0001>

<llo_original>
// kernel: tpu_custom_call.1
$region0: #{tpu_custom_call.1}
  #allocation0 [shape = 'u32[]', space=smem, size = 0x4, offset = 0x4, fixed_abs, tag = 'smem constant byte address 0x4 - core index']
  #allocation1 [shape = 'u32[144,128]{1,0:T(1,128)}', space=vmem, size = 0x12000, scoped, tag = 'internal scratch']
  %s0 = inlined_call_operand.hbm [shape: f32[8,64], index: 0, kind: input, shape index: {}]
  %s1 = inlined_call_operand.hbm [shape: f32[8,64], index: 1, kind: input, shape index: {}]
  %s2 = inlined_call_operand.hbm [shape: f32[8,64], index: 2, kind: input, shape index: {}]
  %s3 = inlined_call_operand.hbm [shape: f32[8,64], index: 3, kind: output, shape index: {0}]
  %s4 = inlined_call_operand.hbm [shape: f32[8,64], index: 4, kind: output, shape index: {1}]
  %5 = xla_tuple %s3, %s4
  %s6 = sld [smem:[#allocation0]]
  $region42: #{tpu_custom_call.1} parent=0
    _
  %s8 = ssub.s32 1, %s6
  %s9 = scalar_select 0, %s8, %s6
  $region1: #{tpu_custom_call.1} parent=0
    #allocation2 [shape = 'u8[4096]{0}', space=vmem, size = 0x1000, scoped, tag = 'input window, operand 0, single buffered']
    #allocation3 [shape = 's32[1]{0}', space=sflag, size = 0x4, scoped, tag = 'scoped memory for tpu_custom_call.1']
    #allocation4 [shape = 's32[1]{0}', space=sflag, size = 0x4, scoped, tag = 'scoped memory for tpu_custom_call.1']
    #allocation5 [shape = 'u8[4096]{0}', space=vmem, size = 0x1000, scoped, tag = 'input window, operand 1, single buffered']
    #allocation6 [shape = 's32[1]{0}', space=sflag, size = 0x4, scoped, tag = 'scoped memory for tpu_custom_call.1']
    #allocation7 [shape = 'u8[4096]{0}', space=vmem, size = 0x1000, scoped, tag = 'input window, operand 2, single buffered']
    #allocation8 [shape = 'u8[4096]{0}', space=vmem, size = 0x1000, scoped, tag = 'output window, operand 0, single buffered']
    #allocation9 [shape = 'u8[4096]{0}', space=vmem, size = 0x1000, scoped, tag = 'output window, operand 1, single buffered']
    #allocation10 [shape = 's32[1]{0}', space=sflag, size = 0x4, scoped, tag = 'scoped memory for tpu_custom_call.1']
    %10 = vsyncpa [#allocation3], 0
    %11 = vsyncpa [#allocation6], 0
    %12 = vsyncpa [#allocation4], 0
    %13 = vsyncpa [#allocation10], 0
    // Predicated region
    $region2: #{tpu_custom_call.1} parent=1 // pred_check
      _
    $region3: #{tpu_custom_call.1} parent=1 // pred_check_branch
      %15 = sbr.rel (0) target = $region5
    $region4: #{tpu_custom_call.1} parent=1 // pred_region
      %s17 = ssub.s32 128, 128
      %18 = vsyncadd [#allocation3], %s17
      %s20 = sshll.u32 [#allocation2], 4
      %s21 = int_to_ptr.vmem [resolvable:$true] %s20
      %23 = dma.hbm_to_vmem [thread:$0]  %s0, 128, %s21, [#allocation3]
    $region5: #{tpu_custom_call.1} parent=1 // pred_fallthru
      _
    // Predicated region
    $region6: #{tpu_custom_call.1} parent=1 // pred_check
      _
    $region7: #{tpu_custom_call.1} parent=1 // pred_check_branch
      %25 = sbr.rel (0) target = $region9
    $region8: #{tpu_custom_call.1} parent=1 // pred_region
      %s27 = ssub.s32 128, 128
      %28 = vsyncadd [#allocation6], %s27
      %s30 = sshll.u32 [#allocation5], 4
      %s31 = int_to_ptr.vmem [resolvable:$true] %s30
      %33 = dma.hbm_to_vmem [thread:$0]  %s1, 128, %s31, [#allocation6]
    $region9: #{tpu_custom_call.1} parent=1 // pred_fallthru
      _
    // Predicated region
    $region10: #{tpu_custom_call.1} parent=1 // pred_check
      _
    $region11: #{tpu_custom_call.1} parent=1 // pred_check_branch
      %35 = sbr.rel (0) target = $region13
    $region12: #{tpu_custom_call.1} parent=1 // pred_region
      %s37 = ssub.s32 128, 128
      %38 = vsyncadd [#allocation6], %s37
      %s40 = sshll.u32 [#allocation7], 4
      %s41 = int_to_ptr.vmem [resolvable:$true] %s40
      %43 = dma.hbm_to_vmem [thread:$0]  %s2, 128, %s41, [#allocation6]
    $region13: #{tpu_custom_call.1} parent=1 // pred_fallthru
      _
    // Predicated region
    $region14: #{tpu_custom_call.1} parent=1 // pred_check
      _
    $region15: #{tpu_custom_call.1} parent=1 // pred_check_branch
      %45 = sbr.rel (0) target = $region17
    $region16: #{tpu_custom_call.1} parent=1 // pred_region
      %46 = dma.done [#allocation3], 128
    $region17: #{tpu_custom_call.1} parent=1 // pred_fallthru
      _
    // Predicated region
    $region18: #{tpu_custom_call.1} parent=1 // pred_check
      _
    $region19: #{tpu_custom_call.1} parent=1 // pred_check_branch
      %48 = sbr.rel (0) target = $region21
    $region20: #{tpu_custom_call.1} parent=1 // pred_region
      %49 = dma.done [#allocation6], 128
    $region21: #{tpu_custom_call.1} parent=1 // pred_fallthru
      _
    // Predicated region
    $region22: #{tpu_custom_call.1} parent=1 // pred_check
      _
    $region23: #{tpu_custom_call.1} parent=1 // pred_check_branch
      %51 = sbr.rel (0) target = $region25
    $region24: #{tpu_custom_call.1} parent=1 // pred_region
      %52 = dma.done [#allocation6], 128
    $region25: #{tpu_custom_call.1} parent=1 // pred_fallthru
      _
    %v53 = vld [vmem:[#allocation7] sm:$0xff]
    %v54 = vld [vmem:[#allocation2] sm:$0xff]
    %v55 = vadd.f32 %v54, %v53
    %vm56 = vcmask 523264
    %57 = vst.msk [vmem:[#allocation8] sm:$0xff] %vm56, %v55
    %v58 = vld [vmem:[#allocation5] sm:$0xff]
    %v59 = vadd.f32 %v58, %v53
    %60 = vst.msk [vmem:[#allocation9] sm:$0xff] %vm56, %v59
    // Predicated region
    $region26: #{tpu_custom_call.1} parent=1 // pred_check
      _
    $region27: #{tpu_custom_call.1} parent=1 // pred_check_branch
      %62 = sbr.rel (0) target = $region29
    $region28: #{tpu_custom_call.1} parent=1 // pred_region
      %s64 = ssub.s32 128, 128
      %65 = vsyncadd [#allocation4], %s64
      %s67 = sshll.u32 [#allocation8], 4
      %s68 = int_to_ptr.vmem [resolvable:$true] %s67
      %70 = dma.vmem_to_hbm [thread:$0]  %s68, 128, %s3, [#allocation4]
    $region29: #{tpu_custom_call.1} parent=1 // pred_fallthru
      _
    // Predicated region
    $region30: #{tpu_custom_call.1} parent=1 // pred_check
      _
    $region31: #{tpu_custom_call.1} parent=1 // pred_check_branch
      %72 = sbr.rel (0) target = $region33
    $region32: #{tpu_custom_call.1} parent=1 // pred_region
      %s74 = ssub.s32 128, 128
      %75 = vsyncadd [#allocation10], %s74
      %s77 = sshll.u32 [#allocation9], 4
      %s78 = int_to_ptr.vmem [resolvable:$true] %s77
      %80 = dma.vmem_to_hbm [thread:$0]  %s78, 128, %s4, [#allocation10]
    $region33: #{tpu_custom_call.1} parent=1 // pred_fallthru
      _
    // Predicated region
    $region34: #{tpu_custom_call.1} parent=1 // pred_check
      _
    $region35: #{tpu_custom_call.1} parent=1 // pred_check_branch
      %82 = sbr.rel (0) target = $region37
    $region36: #{tpu_custom_call.1} parent=1 // pred_region
      %83 = dma.done [#allocation4], 128
    $region37: #{tpu_custom_call.1} parent=1 // pred_fallthru
      _
    // Predicated region
    $region38: #{tpu_custom_call.1} parent=1 // pred_check
      _
    $region39: #{tpu_custom_call.1} parent=1 // pred_check_branch
      %85 = sbr.rel (0) target = $region41
    $region40: #{tpu_custom_call.1} parent=1 // pred_region
      %86 = dma.done [#allocation10], 128
    $region41: #{tpu_custom_call.1} parent=1 // pred_fallthru
      _
    %87 = vsyncpa [#allocation3], 1
    %88 = vsyncpa [#allocation6], 1
    %89 = vsyncpa [#allocation4], 1
    %90 = vsyncpa [#allocation10], 1

</llo_original>
